<compile_context>
chip_gen: v5e
topology: v5e:2x2
jax: 0.10.0
libtpu: 0.0.40
codegen_flags: <defaults>
</compile_context>

<pallas_src>
import functools
import math

import jax
import jax.numpy as jnp
from jax.experimental import pallas as pl
from jax.experimental.pallas import tpu as pltpu


# -----------------------------------------------------------------------------
# Linear kernel: one row-tile of x per grid step, weights/bias resident in VMEM.
# -----------------------------------------------------------------------------
def _linear_kernel(x_ref, w_ref, b_ref, o_ref):
    x = x_ref[...]                                                  # (tm, d_in)
    out = jnp.dot(x, w_ref[...], preferred_element_type=jnp.float32)
    out = out + b_ref[...]                                          # broadcast (1, d_out)
    o_ref[...] = out.astype(o_ref.dtype)


def linear(x2, w, b, *, tm=256):
    """x2: (M, d_in) -> (M, d_out) computing x2 @ w + b."""
    M, d_in = x2.shape
    d_out = w.shape[1]

    # Largest row tile <= tm that is a multiple of 8; pad M up to it (no divisibility assert).
    tile = min(tm, ((M + 7) // 8) * 8)
    tile = max(8, ((tile + 7) // 8) * 8)
    Mp = ((M + tile - 1) // tile) * tile
    xp = x2 if Mp == M else jnp.pad(x2, ((0, Mp - M), (0, 0)))

    b2 = b.reshape(1, d_out)
    bytes_per = x2.dtype.itemsize
    cost = pl.CostEstimate(
        flops=2 * Mp * d_in * d_out,
        transcendentals=0,
        bytes_accessed=(Mp * d_in + d_in * d_out + d_out + Mp * d_out) * bytes_per,
    )

    out = pl.pallas_call(
        _linear_kernel,
        out_shape=jax.ShapeDtypeStruct((Mp, d_out), x2.dtype),
        grid_spec=pltpu.PrefetchScalarGridSpec(
            num_scalar_prefetch=0,
            grid=(Mp // tile,),
            in_specs=[
                pl.BlockSpec((tile, d_in), lambda i: (i, 0)),      # x rows
                pl.BlockSpec((d_in, d_out), lambda i: (0, 0)),     # W (resident)
                pl.BlockSpec((1, d_out), lambda i: (0, 0)),        # b (resident)
            ],
            out_specs=pl.BlockSpec((tile, d_out), lambda i: (i, 0)),
        ),
        compiler_params=pltpu.CompilerParams(
            dimension_semantics=("parallel",),
            vmem_limit_bytes=64 << 20,
        ),
        cost_estimate=cost,
    )(xp, w, b2)

    return out[:M] if Mp != M else out


# -----------------------------------------------------------------------------
# Attention kernel: per (batch*head, q-tile) grid point compute
#   softmax(Q K^T / sqrt(d_k)) @ V for that head's full K/V.
# -----------------------------------------------------------------------------
def _attn_kernel(q_ref, k_ref, v_ref, o_ref, *, scale):
    q = q_ref[0]                                                    # (tq, d_k)
    k = k_ref[0]                                                    # (nk, d_k)
    v = v_ref[0]                                                    # (nk, d_v)
    # Contract over d_k without an explicit transpose of K.
    s = jax.lax.dot_general(q, k, (((1,), (1,)), ((), ())),
                            preferred_element_type=jnp.float32) * scale   # (tq, nk)
    m = jnp.max(s, axis=-1, keepdims=True)
    p = jnp.exp(s - m)
    l = jnp.sum(p, axis=-1, keepdims=True)
    att = p / l                                                     # exact softmax
    out = jnp.dot(att.astype(v.dtype), v, preferred_element_type=jnp.float32)
    o_ref[0] = out.astype(o_ref.dtype)


def _attention(q, k, v, *, d_k, d_v, tq=256):
    """q: (BH, nq, d_k), k: (BH, nk, d_k), v: (BH, nk, d_v) -> (BH, nq, d_v)."""
    BH, nq, _ = q.shape
    nk = k.shape[1]

    tile_q = min(tq, ((nq + 7) // 8) * 8)
    tile_q = max(8, ((tile_q + 7) // 8) * 8)
    nq_p = ((nq + tile_q - 1) // tile_q) * tile_q
    qp = q if nq_p == nq else jnp.pad(q, ((0, 0), (0, nq_p - nq), (0, 0)))

    scale = 1.0 / math.sqrt(d_k)
    bytes_per = q.dtype.itemsize
    cost = pl.CostEstimate(
        flops=2 * BH * nq_p * nk * (d_k + d_v),
        transcendentals=BH * nq_p * nk,
        bytes_accessed=BH * (nq_p * d_k + nk * d_k + nk * d_v + nq_p * d_v) * bytes_per,
    )

    out = pl.pallas_call(
        functools.partial(_attn_kernel, scale=scale),
        out_shape=jax.ShapeDtypeStruct((BH, nq_p, d_v), q.dtype),
        grid_spec=pltpu.PrefetchScalarGridSpec(
            num_scalar_prefetch=0,
            grid=(BH, nq_p // tile_q),
            in_specs=[
                pl.BlockSpec((1, tile_q, d_k), lambda bh, qi: (bh, qi, 0)),
                pl.BlockSpec((1, nk, d_k), lambda bh, qi: (bh, 0, 0)),
                pl.BlockSpec((1, nk, d_v), lambda bh, qi: (bh, 0, 0)),
            ],
            out_specs=pl.BlockSpec((1, tile_q, d_v), lambda bh, qi: (bh, qi, 0)),
        ),
        compiler_params=pltpu.CompilerParams(
            dimension_semantics=("parallel", "parallel"),
            vmem_limit_bytes=64 << 20,
        ),
        cost_estimate=cost,
    )(qp, k, v)

    return out[:, :nq, :] if nq_p != nq else out


# -----------------------------------------------------------------------------
# Full module forward.
# -----------------------------------------------------------------------------
def sdpa_forward(queries, keys, values, wq, bq, wk, bk, wv, bv, wo, bo,
                 *, h, d_k, d_v, tm=256, tq=256):
    """queries: (b_s, nq, d_model); keys/values: (b_s, nk, d_model) -> (b_s, nq, d_model)."""
    b_s, nq, d_model = queries.shape
    nk = keys.shape[1]

    # Projections (Linear: x @ W + b, W stored (in, out)).
    q = linear(queries.reshape(b_s * nq, d_model), wq, bq, tm=tm)   # (b_s*nq, h*d_k)
    k = linear(keys.reshape(b_s * nk, d_model), wk, bk, tm=tm)      # (b_s*nk, h*d_k)
    v = linear(values.reshape(b_s * nk, d_model), wv, bv, tm=tm)    # (b_s*nk, h*d_v)

    # (b_s, n, h, d) -> (b_s, h, n, d) -> (b_s*h, n, d)
    q = q.reshape(b_s, nq, h, d_k).transpose(0, 2, 1, 3).reshape(b_s * h, nq, d_k)
    k = k.reshape(b_s, nk, h, d_k).transpose(0, 2, 1, 3).reshape(b_s * h, nk, d_k)
    v = v.reshape(b_s, nk, h, d_v).transpose(0, 2, 1, 3).reshape(b_s * h, nk, d_v)

    attn = _attention(q, k, v, d_k=d_k, d_v=d_v, tq=tq)             # (b_s*h, nq, d_v)

    # (b_s*h, nq, d_v) -> (b_s, nq, h*d_v)
    attn = attn.reshape(b_s, h, nq, d_v).transpose(0, 2, 1, 3).reshape(b_s * nq, h * d_v)

    out = linear(attn, wo, bo, tm=tm)                               # (b_s*nq, d_model)
    return out.reshape(b_s, nq, d_model)


# -----------------------------------------------------------------------------
# Pure-JAX reference for correctness checking.
# -----------------------------------------------------------------------------
def sdpa_ref(queries, keys, values, wq, bq, wk, bk, wv, bv, wo, bo, *, h, d_k, d_v):
    b_s, nq, d_model = queries.shape
    nk = keys.shape[1]
    hp = jax.lax.Precision.HIGHEST
    q = jnp.einsum("bnd,de->bne", queries, wq, precision=hp) + bq
    q = q.reshape(b_s, nq, h, d_k).transpose(0, 2, 1, 3)
    k = jnp.einsum("bnd,de->bne", keys, wk, precision=hp) + bk
    k = k.reshape(b_s, nk, h, d_k).transpose(0, 2, 3, 1)
    v = jnp.einsum("bnd,de->bne", values, wv, precision=hp) + bv
    v = v.reshape(b_s, nk, h, d_v).transpose(0, 2, 1, 3)
    att = jnp.matmul(q, k, precision=hp) / jnp.sqrt(jnp.float32(d_k))
    att = jax.nn.softmax(att, axis=-1)
    out = jnp.matmul(att, v, precision=hp).transpose(0, 2, 1, 3).reshape(b_s, nq, h * d_v)
    return jnp.einsum("bnf,fd->bnd", out, wo, precision=hp) + bo


if __name__ == "__main__":
    # Small deterministic shapes consistent with the module.
    b_s, nq, nk = 2, 8, 8
    d_model, d_k, d_v, h = 32, 16, 16, 4

    key = jax.random.PRNGKey(0)
    kq, kk, kv, k1, k2, k3, k4 = jax.random.split(key, 7)

    queries = jax.random.normal(kq, (b_s, nq, d_model), jnp.float32)
    keys = jax.random.normal(kk, (b_s, nk, d_model), jnp.float32)
    values = jax.random.normal(kv, (b_s, nk, d_model), jnp.float32)

    def xavier(k, shape):
        fan_in, fan_out = shape
        bound = math.sqrt(6.0 / (fan_in + fan_out))
        return jax.random.uniform(k, shape, jnp.float32, -bound, bound)

    # Weights stored (in_features, out_features); biases zero (matches init_weights).
    wq = xavier(k1, (d_model, h * d_k)); bq = jnp.zeros((h * d_k,), jnp.float32)
    wk = xavier(k2, (d_model, h * d_k)); bk = jnp.zeros((h * d_k,), jnp.float32)
    wv = xavier(k3, (d_model, h * d_v)); bv = jnp.zeros((h * d_v,), jnp.float32)
    wo = xavier(k4, (h * d_v, d_model)); bo = jnp.zeros((d_model,), jnp.float32)

    out = sdpa_forward(queries, keys, values, wq, bq, wk, bk, wv, bv, wo, bo,
                       h=h, d_k=d_k, d_v=d_v)
    out = jax.block_until_ready(out)

    ref = sdpa_ref(queries, keys, values, wq, bq, wk, bk, wv, bv, wo, bo,
                   h=h, d_k=d_k, d_v=d_v)
    assert out.shape == (b_s, nq, d_model)
    assert jnp.allclose(out, ref, atol=1e-3, rtol=1e-3), "mismatch vs reference"

    print("KERNEL_OK")
</pallas_src>

<mosaic_0001>
module attributes {stable_mosaic.version = 11 : i64} {
  func.func @_linear_kernel(%arg0: i32, %arg1: memref<16x32xf32, #tpu.memory_space<vmem>>, %arg2: memref<32x64xf32, #tpu.memory_space<vmem>>, %arg3: memref<1x64xf32, #tpu.memory_space<vmem>>, %arg4: memref<16x64xf32, #tpu.memory_space<vmem>>) attributes {dimension_semantics = [#tpu.dimension_semantics<parallel>], iteration_bounds = array<i64: 1>, scalar_prefetch = 0 : i64, scratch_operands = 0 : i64, tpu.core_type = #tpu.core_type<tc>, window_params = [{transform_indices = @transform_0, window_bounds = array<i64: 16, 32>}, {pipeline_mode = #tpu.pipeline_mode<synchronous>, transform_indices = @transform_1, window_bounds = array<i64: 32, 64>}, {pipeline_mode = #tpu.pipeline_mode<synchronous>, transform_indices = @transform_2, window_bounds = array<i64: 1, 64>}, {transform_indices = @transform_3, window_bounds = array<i64: 16, 64>}]} {
    %c0 = arith.constant 0 : index
    %c0_0 = arith.constant 0 : index
    %0 = vector.load %arg1[%c0, %c0_0] : memref<16x32xf32, #tpu.memory_space<vmem>>, vector<16x32xf32>
    %c0_1 = arith.constant 0 : index
    %c0_2 = arith.constant 0 : index
    %1 = vector.load %arg2[%c0_1, %c0_2] : memref<32x64xf32, #tpu.memory_space<vmem>>, vector<32x64xf32>
    %cst = arith.constant dense<0.000000e+00> : vector<16x64xf32>
    %2 = tpu.matmul %0, %1, %cst {dimension_numbers = #tpu.dot_dimension_numbers<[1], [0], [0], [1], [0, 0, 1, 1], [], []>} : vector<16x32xf32>, vector<32x64xf32>, vector<16x64xf32> -> vector<16x64xf32>
    %c0_3 = arith.constant 0 : index
    %c0_4 = arith.constant 0 : index
    %3 = vector.load %arg3[%c0_3, %c0_4] : memref<1x64xf32, #tpu.memory_space<vmem>>, vector<1x64xf32>
    %4 = vector.broadcast %3 : vector<1x64xf32> to vector<16x64xf32>
    %5 = arith.addf %2, %4 : vector<16x64xf32>
    %c0_5 = arith.constant 0 : index
    %c0_6 = arith.constant 0 : index
    %6 = vector.load %arg4[%c0_5, %c0_6] : memref<16x64xf32, #tpu.memory_space<vmem>>, vector<16x64xf32>
    tpu.vector_store %arg4[%c0_5, %c0_6], %5 {strides = array<i32>} : memref<16x64xf32, #tpu.memory_space<vmem>>, vector<16x64xf32>,
    return
  }
  func.func @transform_0(%arg0: i32) -> (i32, i32) {
    %c0_i32 = arith.constant 0 : i32
    %c0_i32_0 = arith.constant 0 : i32
    return %arg0, %c0_i32 : i32, i32
  }
  func.func @transform_1(%arg0: i32) -> (i32, i32) {
    %c0_i32 = arith.constant 0 : i32
    %c0_i32_0 = arith.constant 0 : i32
    %c0_i32_1 = arith.constant 0 : i32
    return %c0_i32, %c0_i32_0 : i32, i32
  }
  func.func @transform_2(%arg0: i32) -> (i32, i32) {
    %c0_i32 = arith.constant 0 : i32
    %c0_i32_0 = arith.constant 0 : i32
    %c0_i32_1 = arith.constant 0 : i32
    return %c0_i32, %c0_i32_0 : i32, i32
  }
  func.func @transform_3(%arg0: i32) -> (i32, i32) {
    %c0_i32 = arith.constant 0 : i32
    %c0_i32_0 = arith.constant 0 : i32
    return %arg0, %c0_i32 : i32, i32
  }
}

</mosaic_0001>

<llo_original>
// kernel: tpu_custom_call.1
$region0: #{tpu_custom_call.1}
  #allocation0 [shape = 'u32[]', space=smem, size = 0x4, offset = 0x4, fixed_abs, tag = 'smem constant byte address 0x4 - core index']
  #allocation1 [shape = 'u32[72,128]{1,0:T(1,128)}', space=vmem, size = 0x9000, scoped, tag = 'internal scratch']
  %s0 = inlined_call_operand.hbm [shape: f32[16,32], index: 0, kind: input, shape index: {}]
  %s1 = inlined_call_operand.hbm [shape: f32[32,64], index: 1, kind: input, shape index: {}]
  %s2 = inlined_call_operand.vmem [shape: f32[1,64], index: 2, kind: input, shape index: {}]
  %s3 = inlined_call_operand.hbm [shape: f32[16,64], index: 3, kind: output, shape index: {}]
  %s4 = sld [smem:[#allocation0]]
  $region30: #{tpu_custom_call.1} parent=0
    _
  %s6 = ssub.s32 1, %s4
  %s7 = scalar_select 0, %s6, %s4
  $region1: #{tpu_custom_call.1} parent=0
    #allocation2 [shape = 'u8[8192]{0}', space=vmem, size = 0x2000, scoped, tag = 'input window, operand 0, single buffered']
    #allocation3 [shape = 's32[1]{0}', space=sflag, size = 0x4, scoped, tag = 'scoped memory for tpu_custom_call.1']
    #allocation4 [shape = 's32[1]{0}', space=sflag, size = 0x4, scoped, tag = 'scoped memory for tpu_custom_call.1']
    #allocation5 [shape = 'u8[16384]{0}', space=vmem, size = 0x4000, scoped, tag = 'input window, operand 1, single buffered']
    #allocation6 [shape = 's32[1]{0}', space=sflag, size = 0x4, scoped, tag = 'scoped memory for tpu_custom_call.1']
    #allocation7 [shape = 'u8[8192]{0}', space=vmem, size = 0x2000, scoped, tag = 'output window, operand 0, single buffered']
    %8 = vsyncpa [#allocation3], 0
    %9 = vsyncpa [#allocation6], 0
    %10 = vsyncpa [#allocation4], 0
    // Predicated region
    $region2: #{tpu_custom_call.1} parent=1 // pred_check
      _
    $region3: #{tpu_custom_call.1} parent=1 // pred_check_branch
      %12 = sbr.rel (0) target = $region5
    $region4: #{tpu_custom_call.1} parent=1 // pred_region
      %14 = vsyncadd [#allocation3], 0
      %s15 = sshll.u32 %s0, 4
      %s16 = int_to_ptr.hbm [resolvable:$true] %s15
      %s17 = sshll.u32 [#allocation2], 4
      %s18 = int_to_ptr.vmem [resolvable:$true] %s17
      %23 = dma.hbm_to_vmem [thread:$0]  %s16, 256, %s18, [#allocation3], 128, 128, 8
    $region5: #{tpu_custom_call.1} parent=1 // pred_fallthru
      _
    // Predicated region
    $region6: #{tpu_custom_call.1} parent=1 // pred_check
      _
    $region7: #{tpu_custom_call.1} parent=1 // pred_check_branch
      %25 = sbr.rel (0) target = $region9
    $region8: #{tpu_custom_call.1} parent=1 // pred_region
      %27 = vsyncadd [#allocation6], 0
      %s28 = sshll.u32 %s1, 4
      %s29 = int_to_ptr.hbm [resolvable:$true] %s28
      %s30 = sshll.u32 [#allocation5], 4
      %s31 = int_to_ptr.vmem [resolvable:$true] %s30
      %36 = dma.hbm_to_vmem [thread:$0]  %s29, 512, %s31, [#allocation6], 128, 128, 8
    $region9: #{tpu_custom_call.1} parent=1 // pred_fallthru
      _
    // Predicated region
    $region10: #{tpu_custom_call.1} parent=1 // pred_check
      _
    $region11: #{tpu_custom_call.1} parent=1 // pred_check_branch
      %38 = sbr.rel (0) target = $region13
    $region12: #{tpu_custom_call.1} parent=1 // pred_region
      _
    $region13: #{tpu_custom_call.1} parent=1 // pred_fallthru
      _
    // Predicated region
    $region14: #{tpu_custom_call.1} parent=1 // pred_check
      _
    $region15: #{tpu_custom_call.1} parent=1 // pred_check_branch
      %40 = sbr.rel (0) target = $region17
    $region16: #{tpu_custom_call.1} parent=1 // pred_region
      %42 = dma.done [#allocation3], 256
    $region17: #{tpu_custom_call.1} parent=1 // pred_fallthru
      _
    // Predicated region
    $region18: #{tpu_custom_call.1} parent=1 // pred_check
      _
    $region19: #{tpu_custom_call.1} parent=1 // pred_check_branch
      %44 = sbr.rel (0) target = $region21
    $region20: #{tpu_custom_call.1} parent=1 // pred_region
      %46 = dma.done [#allocation6], 512
    $region21: #{tpu_custom_call.1} parent=1 // pred_fallthru
      _
    %v47 = vld [vmem:[#allocation2] sm:$0xff]
    %v48 = vld [vmem:[#allocation2 + $0x8] sm:$0xff]
    %v49 = vld [vmem:[#allocation5] sm:$0xff]
    %v50 = vld [vmem:[#allocation5 + $0x8] sm:$0xff]
    %v51 = vld [vmem:[#allocation5 + $0x10] sm:$0xff]
    %v52 = vld [vmem:[#allocation5 + $0x18] sm:$0xff]
    %v53 = vld [vmem:[%s2] sm:$0x1]
    %v55 = vperm.slane %v53, 0
    %vm57 = vcmask 261120
    %v59 = vsel %vm57, %v47, 0
    %v62 = vsel %vm57, %v48, 0
    %64 = vmatpush.msra.mxu0 0.0
    %65 = vmatpush.msra.mxu0 0.0
    %66 = vmatpush.msra.mxu0 0.0
    %67 = vmatpush.msra.mxu0 0.0
    %68 = vmatpush.msra.mxu0 0.0
    %69 = vmatpush.msra.mxu0 0.0
    %70 = vmatpush.msra.mxu0 0.0
    %71 = vmatpush.msra.mxu0 0.0
    %72 = vmatpush.msra.mxu0 0.0
    %73 = vmatpush.msra.mxu0 0.0
    %74 = vmatpush.msra.mxu0 0.0
    %75 = vmatpush.msra.mxu0 0.0
    %76 = vmatpush.msra.mxu0 %v52
    %77 = vmatpush.msra.mxu0 %v51
    %78 = vmatpush.msra.mxu0 %v50
    %79 = vmatpush.msra.mxu0 %v49
    %80 = vmatmul.f32.gmra.mxu0 %v59
    %v81 = vpop.f32.mrf.mxu0
    %v82 = vadd.f32 %v55, %v81
    %83 = vmatmul.f32.gmra.mxu0 %v62
    %v84 = vpop.f32.mrf.mxu0
    %v85 = vadd.f32 %v55, %v84
    %86 = vdwg.mxu0
    %vm87 = vcmask 523264
    %88 = vst.msk [vmem:[#allocation7] sm:$0xff] %vm87, %v82
    %89 = vst.msk [vmem:[#allocation7 + $0x8] sm:$0xff] %vm87, %v85
    // Predicated region
    $region22: #{tpu_custom_call.1} parent=1 // pred_check
      _
    $region23: #{tpu_custom_call.1} parent=1 // pred_check_branch
      %91 = sbr.rel (0) target = $region25
    $region24: #{tpu_custom_call.1} parent=1 // pred_region
      %93 = vsyncadd [#allocation4], 0
      %s94 = sshll.u32 [#allocation7], 4
      %s95 = int_to_ptr.vmem [resolvable:$true] %s94
      %s96 = sshll.u32 %s3, 4
      %s97 = int_to_ptr.hbm [resolvable:$true] %s96
      %102 = dma.vmem_to_hbm [thread:$0]  %s95, 256, %s97, [#allocation4], 128, 128, 8
    $region25: #{tpu_custom_call.1} parent=1 // pred_fallthru
      _
    // Predicated region
    $region26: #{tpu_custom_call.1} parent=1 // pred_check
      _
    $region27: #{tpu_custom_call.1} parent=1 // pred_check_branch
      %104 = sbr.rel (0) target = $region29
    $region28: #{tpu_custom_call.1} parent=1 // pred_region
      %106 = dma.done [#allocation4], 256
    $region29: #{tpu_custom_call.1} parent=1 // pred_fallthru
      _
    %107 = vsyncpa [#allocation3], 1
    %108 = vsyncpa [#allocation6], 1
    %109 = vsyncpa [#allocation4], 1

</llo_original>
